<compile_context>
chip_gen: v7x
topology: tpu7x:2x2x1
jax: 0.10.0
libtpu: 0.0.40
codegen_flags: <defaults>
</compile_context>

<pallas_src>
import functools

import jax
import jax.numpy as jnp
from jax.experimental import pallas as pl
from jax.experimental.pallas import tpu as pltpu


def heads_kernel(x_ref, w1t_ref, b1_ref, w2t_ref, b2_ref, o_ref):
    # x_ref:   (1, C_in, TM)        pixel tile of one batch element (NCHW-native)
    # w1t_ref: (C_mid, C_in)        first 1x1 conv weight, transposed
    # b1_ref:  (C_mid, 1)
    # w2t_ref: (1, S*n_cls, C_mid)  second conv weight with the Dropout2d mask
    #                               folded in and all MC samples concatenated
    # b2_ref:  (S*n_cls, 1)
    # o_ref:   (1, S*n_cls, TM)     lane-dense output tile (TM multiple of 128)
    x = x_ref[0]                                                   # (C_in, TM)
    h = jnp.dot(w1t_ref[...], x, preferred_element_type=jnp.float32) + b1_ref[...]
    h = jnp.where(h > 0, h, 0.01 * h)                              # LeakyReLU(0.01)
    y = jnp.dot(w2t_ref[0], h, preferred_element_type=jnp.float32) + b2_ref[...]
    o_ref[0] = y.astype(o_ref.dtype)


def _choose_tile(P, B, max_tile=2048, min_steps=8):
    """Largest multiple of 128 dividing P (capped), preferring >= min_steps grid steps."""
    cands = [t for t in range(128, min(P, max_tile) + 1, 128) if P % t == 0]
    if not cands:
        return None
    good = [t for t in cands if B * (P // t) >= min_steps]
    return max(good) if good else max(cands)


def segmentation_heads_pallas(embedding_nchw, w1, b1, w2, b2, drop_mask, *, max_tile=2048):
    """Applies the two 1x1-conv head for all MC-dropout samples in one kernel.

    embedding_nchw: (B, 21, H, W) float32        -- backbone 'out'
    w1: (21, C_mid), b1: (C_mid,)
    w2: (C_mid, n_classes), b2: (n_classes,)
    drop_mask: (n_samples, B, C_mid) float32     -- keep/(1-p) Dropout2d mask
    returns: (B, n_classes, H, W, n_samples) float32  (== torch.stack(..., dim=-1))
    """
    B, C_in, H, W = embedding_nchw.shape
    P = H * W
    C_mid = w1.shape[1]
    n_classes = w2.shape[1]
    S = drop_mask.shape[0]
    SN = S * n_classes

    # NCHW-native flatten of the pixel axes; no input transpose needed.
    x = embedding_nchw.reshape(B, C_in, P).astype(jnp.float32)

    tile_m = _choose_tile(P, B, max_tile=max_tile)
    P_pad = P
    if tile_m is None:
        # H*W not a multiple of 128: pad the pixel axis, slice the tail off below.
        tile_m = min(max_tile, ((P + 127) // 128) * 128)
        P_pad = ((P + tile_m - 1) // tile_m) * tile_m
        x = jnp.pad(x, ((0, 0), (0, 0), (0, P_pad - P)))

    w1t = w1.T.astype(jnp.float32)                                 # (C_mid, C_in)
    b1r = b1.reshape(C_mid, 1).astype(jnp.float32)
    # Fold the Dropout2d per-(sample,batch,channel) mask into the second conv
    # weights and concatenate all samples along the output-channel axis:
    #   w2t[b, s*n_cls + n, c] = drop_mask[s, b, c] * w2[c, n]
    w2t = jnp.einsum(
        "sbc,cn->bsnc", drop_mask.astype(jnp.float32), w2.astype(jnp.float32)
    ).reshape(B, SN, C_mid)
    b2r = jnp.tile(b2.astype(jnp.float32), S).reshape(SN, 1)

    grid = (B, P_pad // tile_m)

    flops = 2 * B * P_pad * (C_in * C_mid + C_mid * SN)
    bytes_accessed = 4 * (
        B * C_in * P_pad + B * SN * P_pad + B * SN * C_mid + C_mid * C_in + C_mid + SN
    )

    out = pl.pallas_call(
        heads_kernel,
        out_shape=jax.ShapeDtypeStruct((B, SN, P_pad), jnp.float32),
        grid_spec=pltpu.PrefetchScalarGridSpec(
            num_scalar_prefetch=0,
            grid=grid,
            in_specs=[
                pl.BlockSpec((1, C_in, tile_m), lambda b, t: (b, 0, t)),
                pl.BlockSpec((C_mid, C_in), lambda b, t: (0, 0)),
                pl.BlockSpec((C_mid, 1), lambda b, t: (0, 0)),
                pl.BlockSpec((1, SN, C_mid), lambda b, t: (b, 0, 0)),
                pl.BlockSpec((SN, 1), lambda b, t: (0, 0)),
            ],
            out_specs=pl.BlockSpec((1, SN, tile_m), lambda b, t: (b, 0, t)),
        ),
        compiler_params=pltpu.CompilerParams(
            dimension_semantics=("parallel", "parallel"),
        ),
        cost_estimate=pl.CostEstimate(
            flops=flops, transcendentals=0, bytes_accessed=bytes_accessed
        ),
    )(x, w1t, b1r, w2t, b2r)

    out = out[:, :, :P].reshape(B, S, n_classes, H, W)
    # Final permute to match the PyTorch contract torch.stack([...], dim=-1):
    # (B, n_classes, H, W, S).
    # TODO(synk): a consumer that accepts (B, S, n_classes, H, W) directly would
    # avoid this last HBM round trip.
    return jnp.transpose(out, (0, 2, 3, 4, 1))


def _reference(embedding_nchw, w1, b1, w2, b2, drop_mask):
    # Pure-JAX reference of the same math (mask applied between the two convs).
    x = jnp.transpose(embedding_nchw, (0, 2, 3, 1))               # (B, H, W, C_in)
    outs = []
    for s in range(drop_mask.shape[0]):
        h = jnp.einsum("bhwc,cm->bhwm", x, w1) + b1
        h = jnp.where(h > 0, h, 0.01 * h)
        h = h * drop_mask[s][:, None, None, :]
        y = jnp.einsum("bhwm,mn->bhwn", h, w2) + b2
        outs.append(y)
    out = jnp.stack(outs, axis=-1)                                # (B, H, W, n_cls, S)
    return jnp.transpose(out, (0, 3, 1, 2, 4))                    # (B, n_cls, H, W, S)


if __name__ == "__main__":
    key = jax.random.PRNGKey(0)
    k_emb, k_w1, k_b1, k_w2, k_b2, k_drop = jax.random.split(key, 6)

    # Module hyper-parameters (small, consistent with the PyTorch module):
    B, H, W = 2, 16, 16
    C_in = 21                                   # backbone 'out' channels (VOC labels)
    n_classes = 25
    C_mid = 21 + (n_classes - 21) // 2          # = 23
    n_train_samples = 3                         # self.n_samples in the forward pass
    p_drop = 0.1

    # Backbone embedding stand-in (frozen backbone output), deterministic.
    embedding = jax.random.normal(k_emb, (B, C_in, H, W), dtype=jnp.float32)

    # Deterministic head parameters (Conv2d 1x1 weights stored transposed for matmul).
    w1 = 0.1 * jax.random.normal(k_w1, (C_in, C_mid), dtype=jnp.float32)
    b1 = 0.1 * jax.random.normal(k_b1, (C_mid,), dtype=jnp.float32)
    w2 = 0.1 * jax.random.normal(k_w2, (C_mid, n_classes), dtype=jnp.float32)
    b2 = 0.1 * jax.random.normal(k_b2, (n_classes,), dtype=jnp.float32)

    # Dropout2d(0.1) channel keep-mask per (sample, batch, channel), scaled by 1/(1-p).
    keep = jax.random.bernoulli(k_drop, 1.0 - p_drop, (n_train_samples, B, C_mid))
    drop_mask = keep.astype(jnp.float32) / (1.0 - p_drop)

    run = jax.jit(functools.partial(segmentation_heads_pallas, max_tile=2048))
    out = run(embedding, w1, b1, w2, b2, drop_mask)
    jax.block_until_ready(out)

    assert out.shape == (B, n_classes, H, W, n_train_samples), out.shape
    ref = _reference(embedding, w1, b1, w2, b2, drop_mask)
    assert jnp.allclose(out, ref, atol=1e-5, rtol=1e-5)

    print("KERNEL_OK")
</pallas_src>

<mosaic_0001>
module attributes {stable_mosaic.version = 11 : i64} {
  func.func @heads_kernel(%arg0: i32, %arg1: i32, %arg2: memref<1x21x256xf32, #tpu.memory_space<vmem>>, %arg3: memref<23x21xf32, #tpu.memory_space<vmem>>, %arg4: memref<23x1xf32, #tpu.memory_space<vmem>>, %arg5: memref<1x75x23xf32, #tpu.memory_space<vmem>>, %arg6: memref<75x1xf32, #tpu.memory_space<vmem>>, %arg7: memref<1x75x256xf32, #tpu.memory_space<vmem>>) attributes {dimension_semantics = [#tpu.dimension_semantics<parallel>, #tpu.dimension_semantics<parallel>], iteration_bounds = array<i64: 2, 1>, scalar_prefetch = 0 : i64, scratch_operands = 0 : i64, tpu.core_type = #tpu.core_type<tc>, window_params = [{transform_indices = @transform_0, window_bounds = array<i64: 1, 21, 256>}, {pipeline_mode = #tpu.pipeline_mode<synchronous>, transform_indices = @transform_1, window_bounds = array<i64: 23, 21>}, {pipeline_mode = #tpu.pipeline_mode<synchronous>, transform_indices = @transform_2, window_bounds = array<i64: 23, 1>}, {transform_indices = @transform_3, window_bounds = array<i64: 1, 75, 23>}, {pipeline_mode = #tpu.pipeline_mode<synchronous>, transform_indices = @transform_4, window_bounds = array<i64: 75, 1>}, {transform_indices = @transform_5, window_bounds = array<i64: 1, 75, 256>}]} {
    %c0 = arith.constant 0 : index
    %c0_0 = arith.constant 0 : index
    %c0_1 = arith.constant 0 : index
    %0 = vector.load %arg2[%c0, %c0_0, %c0_1] : memref<1x21x256xf32, #tpu.memory_space<vmem>>, vector<1x21x256xf32>
    %1 = vector.shape_cast %0 : vector<1x21x256xf32> to vector<21x256xf32>
    %c0_2 = arith.constant 0 : index
    %c0_3 = arith.constant 0 : index
    %2 = vector.load %arg3[%c0_2, %c0_3] : memref<23x21xf32, #tpu.memory_space<vmem>>, vector<23x21xf32>
    %cst = arith.constant dense<0.000000e+00> : vector<23x256xf32>
    %3 = tpu.matmul %2, %1, %cst {dimension_numbers = #tpu.dot_dimension_numbers<[1], [0], [0], [1], [0, 0, 1, 1], [], []>} : vector<23x21xf32>, vector<21x256xf32>, vector<23x256xf32> -> vector<23x256xf32>
    %c0_4 = arith.constant 0 : index
    %c0_5 = arith.constant 0 : index
    %4 = vector.load %arg4[%c0_4, %c0_5] : memref<23x1xf32, #tpu.memory_space<vmem>>, vector<23x1xf32>
    %5 = vector.broadcast %4 : vector<23x1xf32> to vector<23x256xf32>
    %6 = arith.addf %3, %5 : vector<23x256xf32>
    %cst_6 = arith.constant 0.000000e+00 : f32
    %7 = vector.broadcast %cst_6 : f32 to vector<23x256xf32>
    %8 = arith.cmpf ogt, %6, %7 : vector<23x256xf32>
    %cst_7 = arith.constant 0.00999999977 : f32
    %9 = vector.broadcast %cst_7 : f32 to vector<23x256xf32>
    %10 = arith.mulf %9, %6 : vector<23x256xf32>
    %11 = arith.select %8, %6, %10 : vector<23x256xi1>, vector<23x256xf32>
    %c0_8 = arith.constant 0 : index
    %c0_9 = arith.constant 0 : index
    %c0_10 = arith.constant 0 : index
    %12 = vector.load %arg5[%c0_8, %c0_9, %c0_10] : memref<1x75x23xf32, #tpu.memory_space<vmem>>, vector<1x75x23xf32>
    %13 = vector.shape_cast %12 : vector<1x75x23xf32> to vector<75x23xf32>
    %cst_11 = arith.constant dense<0.000000e+00> : vector<75x256xf32>
    %14 = tpu.matmul %13, %11, %cst_11 {dimension_numbers = #tpu.dot_dimension_numbers<[1], [0], [0], [1], [0, 0, 1, 1], [], []>} : vector<75x23xf32>, vector<23x256xf32>, vector<75x256xf32> -> vector<75x256xf32>
    %c0_12 = arith.constant 0 : index
    %c0_13 = arith.constant 0 : index
    %15 = vector.load %arg6[%c0_12, %c0_13] : memref<75x1xf32, #tpu.memory_space<vmem>>, vector<75x1xf32>
    %16 = vector.broadcast %15 : vector<75x1xf32> to vector<75x256xf32>
    %17 = arith.addf %14, %16 : vector<75x256xf32>
    %c0_14 = arith.constant 0 : index
    %c0_15 = arith.constant 0 : index
    %c0_16 = arith.constant 0 : index
    %18 = vector.load %arg7[%c0_14, %c0_15, %c0_16] : memref<1x75x256xf32, #tpu.memory_space<vmem>>, vector<1x75x256xf32>
    %19 = vector.shape_cast %18 : vector<1x75x256xf32> to vector<75x256xf32>
    %20 = vector.shape_cast %17 : vector<75x256xf32> to vector<1x75x256xf32>
    tpu.vector_store %arg7[%c0_14, %c0_15, %c0_16], %20 {strides = array<i32>} : memref<1x75x256xf32, #tpu.memory_space<vmem>>, vector<1x75x256xf32>,
    return
  }
  func.func @transform_0(%arg0: i32, %arg1: i32) -> (i32, i32, i32) {
    %c0_i32 = arith.constant 0 : i32
    %c0_i32_0 = arith.constant 0 : i32
    return %arg0, %c0_i32, %arg1 : i32, i32, i32
  }
  func.func @transform_1(%arg0: i32, %arg1: i32) -> (i32, i32) {
    %c0_i32 = arith.constant 0 : i32
    %c0_i32_0 = arith.constant 0 : i32
    %c0_i32_1 = arith.constant 0 : i32
    return %c0_i32, %c0_i32_0 : i32, i32
  }
  func.func @transform_2(%arg0: i32, %arg1: i32) -> (i32, i32) {
    %c0_i32 = arith.constant 0 : i32
    %c0_i32_0 = arith.constant 0 : i32
    %c0_i32_1 = arith.constant 0 : i32
    return %c0_i32, %c0_i32_0 : i32, i32
  }
  func.func @transform_3(%arg0: i32, %arg1: i32) -> (i32, i32, i32) {
    %c0_i32 = arith.constant 0 : i32
    %c0_i32_0 = arith.constant 0 : i32
    %c0_i32_1 = arith.constant 0 : i32
    return %arg0, %c0_i32, %c0_i32_0 : i32, i32, i32
  }
  func.func @transform_4(%arg0: i32, %arg1: i32) -> (i32, i32) {
    %c0_i32 = arith.constant 0 : i32
    %c0_i32_0 = arith.constant 0 : i32
    %c0_i32_1 = arith.constant 0 : i32
    return %c0_i32, %c0_i32_0 : i32, i32
  }
  func.func @transform_5(%arg0: i32, %arg1: i32) -> (i32, i32, i32) {
    %c0_i32 = arith.constant 0 : i32
    %c0_i32_0 = arith.constant 0 : i32
    return %arg0, %c0_i32, %arg1 : i32, i32, i32
  }
}

</mosaic_0001>

<llo_original>
// kernel: tile.8
$region0: #{tile.8}
  #allocation0 [shape = 's32[1]{0}', space=sflag, size = 0x4, scoped, tag = 'scoped memory for tile.8']
  %s0 = inlined_call_operand.vmem [shape: f32[25], index: 0, kind: input, shape index: {}]
  %s1 = inlined_call_operand.vmem [shape: f32[3,25], index: 1, kind: output, shape index: {}]
  // Predicated region
  $region2: #{tile.8} parent=0 // pred_check
    _
  $region3: #{tile.8} parent=0 // pred_check_branch
    %3 = sbr.rel (0) target = $region5
  $region4: #{tile.8} parent=0 // pred_region
    _
  $region5: #{tile.8} parent=0 // pred_fallthru
    _
  %v4 = vld [vmem:[%s0] ss:$0 sm:$0xff]
  %5 = vst [vmem:[%s1] sm:$0xf] %v4

// kernel: tile.0
$region0: #{tile.0}
  %s0 = inlined_call_operand.vmem [shape: f32[3,25], index: 0, kind: input, shape index: {}]
  %s1 = inlined_call_operand.vmem [shape: f32[75,1], index: 1, kind: output, shape index: {}]
  $region1: #{tile.0} parent=0
    #allocation0 [shape = 'u8[4096]{0}', space=vmem, size = 0x1000, scoped, tag = 'scoped mem for input reshape']
    %s3 = sshllo.u32 0, 4
    %v4 = vld [vmem:[%s0] sm:%s3]
    %5 = vst [vmem:[#allocation0] sm:%s3] %v4
    %v6 = vld [vmem:[#allocation0] sm:$0x7]
    %vm7 = vcmask 7168
    %8 = vst.msk [vmem:[%s1] ss:$25 sm:$0x7] %vm7, %v6
    %v9 = vld.sshfl [vmem:[#allocation0] sm:$0xff pattern:$0x11111120]
    %10 = vrot.lane.b32.xlu0 %v9, 127
    %v11 = vpop.permute.xlu0 %10
    %vm12 = vcmask 7168
    %s13 = scalar_lea.vmem %s1, 1
    %14 = vst.msk [vmem:[%s13] ss:$50 sm:$0x3] %vm12, %v11
    %s15 = scalar_lea.vmem %s1, 24
    %16 = vst.msk [vmem:[%s15] sm:$0x4] %vm12, %v11
    %v17 = vld.sshfl [vmem:[#allocation0] sm:$0xff pattern:$0x11111120]
    %18 = vrot.lane.b32.xlu0 %v17, 126
    %v19 = vpop.permute.xlu0 %18
    %vm20 = vcmask 7168
    %s21 = scalar_lea.vmem %s1, 2
    %22 = vst.msk [vmem:[%s21] ss:$50 sm:$0x3] %vm20, %v19
    %s23 = scalar_lea.vmem %s1, 25
    %24 = vst.msk [vmem:[%s23] sm:$0x4] %vm20, %v19
    %v25 = vld.sshfl [vmem:[#allocation0] sm:$0xff pattern:$0x11111120]
    %26 = vrot.lane.b32.xlu0 %v25, 125
    %v27 = vpop.permute.xlu0 %26
    %vm28 = vcmask 7168
    %s29 = scalar_lea.vmem %s1, 3
    %30 = vst.msk [vmem:[%s29] ss:$50 sm:$0x3] %vm28, %v27
    %s31 = scalar_lea.vmem %s1, 26
    %32 = vst.msk [vmem:[%s31] sm:$0x4] %vm28, %v27
    %v33 = vld.sshfl [vmem:[#allocation0] sm:$0xff pattern:$0x11111120]
    %34 = vrot.lane.b32.xlu0 %v33, 124
    %v35 = vpop.permute.xlu0 %34
    %vm36 = vcmask 7168
    %s37 = scalar_lea.vmem %s1, 4
    %38 = vst.msk [vmem:[%s37] ss:$50 sm:$0x3] %vm36, %v35
    %s39 = scalar_lea.vmem %s1, 27
    %40 = vst.msk [vmem:[%s39] sm:$0x4] %vm36, %v35
    %v41 = vld.sshfl [vmem:[#allocation0] sm:$0xff pattern:$0x11111120]
    %42 = vrot.lane.b32.xlu0 %v41, 123
    %v43 = vpop.permute.xlu0 %42
    %vm44 = vcmask 7168
    %s45 = scalar_lea.vmem %s1, 5
    %46 = vst.msk [vmem:[%s45] ss:$50 sm:$0x3] %vm44, %v43
    %s47 = scalar_lea.vmem %s1, 28
    %48 = vst.msk [vmem:[%s47] sm:$0x4] %vm44, %v43
    %v49 = vld.sshfl [vmem:[#allocation0] sm:$0xff pattern:$0x11111120]
    %50 = vrot.lane.b32.xlu0 %v49, 122
    %v51 = vpop.permute.xlu0 %50
    %vm52 = vcmask 7168
    %s53 = scalar_lea.vmem %s1, 6
    %54 = vst.msk [vmem:[%s53] ss:$50 sm:$0x3] %vm52, %v51
    %s55 = scalar_lea.vmem %s1, 29
    %56 = vst.msk [vmem:[%s55] sm:$0x4] %vm52, %v51
    %v57 = vld.sshfl [vmem:[#allocation0] sm:$0xff pattern:$0x22222201]
    %58 = vrot.lane.b32.xlu0 %v57, 121
    %v59 = vpop.permute.xlu0 %58
    %vm60 = vcmask 7168
    %s61 = scalar_lea.vmem %s1, 32
    %62 = vst.msk [vmem:[%s61] ss:$-25 sm:$0x3] %vm60, %v59
    %s63 = scalar_lea.vmem %s1, 55
    %64 = vst.msk [vmem:[%s63] sm:$0x4] %vm60, %v59
    %v65 = vld.sshfl [vmem:[#allocation0] sm:$0xff pattern:$0x22222201]
    %66 = vrot.lane.b32.xlu0 %v65, 120
    %v67 = vpop.permute.xlu0 %66
    %vm68 = vcmask 7168
    %s69 = scalar_lea.vmem %s1, 33
    %70 = vst.msk [vmem:[%s69] ss:$-25 sm:$0x3] %vm68, %v67
    %s71 = scalar_lea.vmem %s1, 56
    %72 = vst.msk [vmem:[%s71] sm:$0x4] %vm68, %v67
    %v73 = vld.sshfl [vmem:[#allocation0] sm:$0xff pattern:$0x22222201]
    %74 = vrot.lane.b32.xlu0 %v73, 119
    %v75 = vpop.permute.xlu0 %74
    %vm76 = vcmask 7168
    %s77 = scalar_lea.vmem %s1, 34
    %78 = vst.msk [vmem:[%s77] ss:$-25 sm:$0x3] %vm76, %v75
    %s79 = scalar_lea.vmem %s1, 57
    %80 = vst.msk [vmem:[%s79] sm:$0x4] %vm76, %v75
    %v81 = vld.sshfl [vmem:[#allocation0] sm:$0xff pattern:$0x22222201]
    %82 = vrot.lane.b32.xlu0 %v81, 118
    %v83 = vpop.permute.xlu0 %82
    %vm84 = vcmask 7168
    %s85 = scalar_lea.vmem %s1, 35
    %86 = vst.msk [vmem:[%s85] ss:$-25 sm:$0x3] %vm84, %v83
    %s87 = scalar_lea.vmem %s1, 58
    %88 = vst.msk [vmem:[%s87] sm:$0x4] %vm84, %v83
    %v89 = vld.sshfl [vmem:[#allocation0] sm:$0xff pattern:$0x22222201]
    %90 = vrot.lane.b32.xlu0 %v89, 117
    %v91 = vpop.permute.xlu0 %90
    %vm92 = vcmask 7168
    %s93 = scalar_lea.vmem %s1, 36
    %94 = vst.msk [vmem:[%s93] ss:$-25 sm:$0x3] %vm92, %v91
    %s95 = scalar_lea.vmem %s1, 59
    %96 = vst.msk [vmem:[%s95] sm:$0x4] %vm92, %v91
    %v97 = vld.sshfl [vmem:[#allocation0] sm:$0xff pattern:$0x22222201]
    %98 = vrot.lane.b32.xlu0 %v97, 116
    %v99 = vpop.permute.xlu0 %98
    %vm100 = vcmask 7168
    %s101 = scalar_lea.vmem %s1, 37
    %102 = vst.msk [vmem:[%s101] ss:$-25 sm:$0x3] %vm100, %v99
    %s103 = scalar_lea.vmem %s1, 60
    %104 = vst.msk [vmem:[%s103] sm:$0x4] %vm100, %v99
    %v105 = vld.sshfl [vmem:[#allocation0] sm:$0xff pattern:$0x22222201]
    %106 = vrot.lane.b32.xlu0 %v105, 115
    %v107 = vpop.permute.xlu0 %106
    %vm108 = vcmask 7168
    %s109 = scalar_lea.vmem %s1, 38
    %110 = vst.msk [vmem:[%s109] ss:$-25 sm:$0x3] %vm108, %v107
    %s111 = scalar_lea.vmem %s1, 61
    %112 = vst.msk [vmem:[%s111] sm:$0x4] %vm108, %v107
    %s113 = scalar_lea.vmem [#allocation0], 2
    %v114 = vld [vmem:[%s113] ss:$-1 sm:$0x7]
    %115 = vrot.lane.b32.xlu0 %v114, 114
    %v116 = vpop.permute.xlu0 %115
    %vm117 = vcmask 7168
    %s118 = scalar_lea.vmem %s1, 64
    %119 = vst.msk [vmem:[%s118] ss:$-25 sm:$0x7] %vm117, %v116
    %s120 = scalar_lea.vmem [#allocation0], 2
    %v121 = vld [vmem:[%s120] ss:$-1 sm:$0x7]
    %122 = vrot.lane.b32.xlu0 %v121, 113
    %v123 = vpop.permute.xlu0 %122
    %vm124 = vcmask 7168
    %s125 = scalar_lea.vmem %s1, 65
    %126 = vst.msk [vmem:[%s125] ss:$-25 sm:$0x7] %vm124, %v123
    %s127 = scalar_lea.vmem [#allocation0], 2
    %v128 = vld [vmem:[%s127] ss:$-1 sm:$0x7]
    %129 = vrot.lane.b32.xlu0 %v128, 112
    %v130 = vpop.permute.xlu0 %129
    %vm131 = vcmask 7168
    %s132 = scalar_lea.vmem %s1, 66
    %133 = vst.msk [vmem:[%s132] ss:$-25 sm:$0x7] %vm131, %v130
    %s134 = scalar_lea.vmem [#allocation0], 2
    %v135 = vld [vmem:[%s134] ss:$-1 sm:$0x7]
    %136 = vrot.lane.b32.xlu0 %v135, 111
    %v137 = vpop.permute.xlu0 %136
    %vm138 = vcmask 7168
    %s139 = scalar_lea.vmem %s1, 67
    %140 = vst.msk [vmem:[%s139] ss:$-25 sm:$0x7] %vm138, %v137
    %s141 = scalar_lea.vmem [#allocation0], 2
    %v142 = vld [vmem:[%s141] ss:$-1 sm:$0x7]
    %143 = vrot.lane.b32.xlu0 %v142, 110
    %v144 = vpop.permute.xlu0 %143
    %vm145 = vcmask 7168
    %s146 = scalar_lea.vmem %s1, 68
    %147 = vst.msk [vmem:[%s146] ss:$-25 sm:$0x7] %vm145, %v144
    %s148 = scalar_lea.vmem [#allocation0], 2
    %v149 = vld [vmem:[%s148] ss:$-1 sm:$0x7]
    %150 = vrot.lane.b32.xlu0 %v149, 109
    %v151 = vpop.permute.xlu0 %150
    %vm152 = vcmask 7168
    %s153 = scalar_lea.vmem %s1, 69
    %154 = vst.msk [vmem:[%s153] ss:$-25 sm:$0x7] %vm152, %v151
    %s155 = scalar_lea.vmem [#allocation0], 2
    %v156 = vld [vmem:[%s155] ss:$-1 sm:$0x7]
    %157 = vrot.lane.b32.xlu0 %v156, 108
    %v158 = vpop.permute.xlu0 %157
    %vm159 = vcmask 7168
    %s160 = scalar_lea.vmem %s1, 70
    %161 = vst.msk [vmem:[%s160] ss:$-25 sm:$0x7] %vm159, %v158
    %s162 = scalar_lea.vmem [#allocation0], 2
    %v163 = vld [vmem:[%s162] ss:$-1 sm:$0x7]
    %164 = vrot.lane.b32.xlu0 %v163, 107
    %v165 = vpop.permute.xlu0 %164
    %vm166 = vcmask 7168
    %s167 = scalar_lea.vmem %s1, 71
    %168 = vst.msk [vmem:[%s167] ss:$-25 sm:$0x7] %vm166, %v165
    %s169 = scalar_lea.vmem [#allocation0], 2
    %v170 = vld [vmem:[%s169] ss:$-1 sm:$0x7]
    %171 = vrot.lane.b32.xlu0 %v170, 106
    %v172 = vpop.permute.xlu0 %171
    %vm173 = vcmask 7168
    %s174 = scalar_lea.vmem %s1, 72
    %175 = vst.msk [vmem:[%s174] ss:$-25 sm:$0x7] %vm173, %v172
    %s176 = scalar_lea.vmem [#allocation0], 2
    %v177 = vld [vmem:[%s176] ss:$-1 sm:$0x7]
    %178 = vrot.lane.b32.xlu0 %v177, 105
    %v179 = vpop.permute.xlu0 %178
    %vm180 = vcmask 7168
    %s181 = scalar_lea.vmem %s1, 73
    %182 = vst.msk [vmem:[%s181] ss:$-25 sm:$0x7] %vm180, %v179
    %s183 = scalar_lea.vmem [#allocation0], 2
    %v184 = vld [vmem:[%s183] ss:$-1 sm:$0x7]
    %185 = vrot.lane.b32.xlu0 %v184, 104
    %v186 = vpop.permute.xlu0 %185
    %vm187 = vcmask 7168
    %s188 = scalar_lea.vmem %s1, 74
    %189 = vst.msk [vmem:[%s188] ss:$-25 sm:$0x7] %vm187, %v186

// kernel: segmentation_heads_pallas.1
$region0: #{segmentation_heads_pallas.1}
  #allocation0 [shape = 'u32[]', space=smem, size = 0x4, offset = 0x4, fixed_abs, tag = 'smem constant byte address 0x4 - core index']
  #allocation1 [shape = 'u32[144,128]{1,0:T(1,128)}', space=vmem, size = 0x12000, scoped, tag = 'internal scratch']
  %s0 = inlined_call_operand.vmem [shape: f32[2,21,256], index: 0, kind: input, shape index: {}]
  %s1 = inlined_call_operand.vmem [shape: f32[23,21], index: 1, kind: input, shape index: {}]
  %s2 = inlined_call_operand.vmem [shape: f32[23,1], index: 2, kind: input, shape index: {}]
  %s3 = inlined_call_operand.vmem [shape: f32[2,75,23], index: 3, kind: input, shape index: {}]
  %s4 = inlined_call_operand.vmem [shape: f32[75,1], index: 4, kind: input, shape index: {}]
  %s5 = inlined_call_operand.vmem [shape: f32[2,75,256], index: 5, kind: output, shape index: {}]
  %s6 = sld [smem:[#allocation0]]
  $region53: #{segmentation_heads_pallas.1} parent=0
    _
  %s8 = ssub.s32 1, %s6
  %s9 = scalar_select 0, %s8, %s6
  loop: start=0, step=1, limit=4
  $region2: #{segmentation_heads_pallas.1} parent=0 // loop_pre_header
    _
  $region3: #{segmentation_heads_pallas.1} parent=0 // loop_header
    %s11 = sphi 0, %s15
    %p12 = scmp.ge.s32.totalorder %s11, 4
    %s18 = sphi 0, %s30
    %s19 = sphi 0, %s26
    %s20 = sphi 0, %s18
    %s21 = sphi 0, %s19
    %s22 = sphi 0, %s20
    %s23 = sphi 0, %s21
    %s35 = sphi 0, %s37
    %s38 = sphi 0, %s35
    %s39 = sphi 0, %s38
    %s55 = sphi 0, %s39
    %s59 = sphi 0, %s59
    %s61 = sphi 0, %s59
    %s62 = sphi 0, %s61
    %s76 = sphi 0, %s62
    %s80 = sphi 0, %s80
    %s82 = sphi 0, %s80
    %s83 = sphi 0, %s82
    %s97 = sphi 0, %s83
    %s103 = sphi 0, %s105
    %s106 = sphi 0, %s103
    %s107 = sphi 0, %s106
    %s123 = sphi 0, %s107
    %s127 = sphi 0, %s127
    %s129 = sphi 0, %s127
    %s130 = sphi 0, %s129
    %s144 = sphi 0, %s130
    %s152 = sphi 0, %s154
    %s155 = sphi 0, %s152
    %s156 = sphi 0, %s155
    %s172 = sphi 0, %s156
  $region4: #{segmentation_heads_pallas.1} parent=0 // loop_header_branch
    %14 = sbr.rel (%p12) target = $region8
  $region5: #{segmentation_heads_pallas.1} parent=0 // loop_body
    %s16 = ssub.s32 %s11, 1
    %s17 = ssub.s32 %s11, 2
    %s24 = sadd.s32 1, %s19
    %p25 = scmp.ge.s32.totalorder %s24, 1
    %s26 = scalar_select %p25, 0, %s24
    %s27 = sadd.s32 1, %s18
    %s28 = scalar_select %p25, %s27, %s18
    %p29 = scmp.ge.s32.totalorder %s28, 2
    %s30 = scalar_select %p29, 0, %s28
    %s31 = ssub.s32 %s18, %s30
    %s32 = ssub.s32 %s19, %s26
    %s33 = sor.u32 %s31, %s32
    %p34 = scmp.eq.s32.totalorder %s33, 0
    %s36 = sadd.s32 %s35, 1
    %s37 = scalar_select %p34, %s35, %s36
    %p40 = pneg %p34
    %p41 = scmp.eq.s32.totalorder %s11, 1
    %p42 = por %p40, %p41
    %p43 = scmp.ne.s32.totalorder %s35, %s38
    %p44 = scmp.eq.s32.totalorder %s11, 0
    %p45 = por %p43, %p44
    %p46 = scmp.ne.s32.totalorder %s35, %s38
    %p47 = scmp.eq.s32.totalorder %s16, 1
    %p48 = por %p46, %p47
    %p49 = scmp.ne.s32.totalorder %s38, %s39
    %p50 = scmp.eq.s32.totalorder %s16, 0
    %p51 = por %p49, %p50
    %p52 = scmp.ne.s32.totalorder %s38, %s39
    %p53 = scmp.eq.s32.totalorder %s17, 1
    %p54 = por %p52, %p53
    %p56 = scmp.ne.s32.totalorder %s39, %s55
    %p57 = scmp.eq.s32.totalorder %s17, 0
    %p58 = por %p56, %p57
    %s60 = sadd.s32 %s59, 1
    %p63 = scmp.eq.s32.totalorder %s11, 1
    %p64 = scmp.ne.s32.totalorder %s59, %s61
    %p65 = scmp.eq.s32.totalorder %s11, 0
    %p66 = por %p64, %p65
    %p67 = scmp.ne.s32.totalorder %s59, %s61
    %p68 = scmp.eq.s32.totalorder %s16, 1
    %p69 = por %p67, %p68
    %p70 = scmp.ne.s32.totalorder %s61, %s62
    %p71 = scmp.eq.s32.totalorder %s16, 0
    %p72 = por %p70, %p71
    %p73 = scmp.ne.s32.totalorder %s61, %s62
    %p74 = scmp.eq.s32.totalorder %s17, 1
    %p75 = por %p73, %p74
    %p77 = scmp.ne.s32.totalorder %s62, %s76
    %p78 = scmp.eq.s32.totalorder %s17, 0
    %p79 = por %p77, %p78
    %s81 = sadd.s32 %s80, 1
    %p84 = scmp.eq.s32.totalorder %s11, 1
    %p85 = scmp.ne.s32.totalorder %s80, %s82
    %p86 = scmp.eq.s32.totalorder %s11, 0
    %p87 = por %p85, %p86
    %p88 = scmp.ne.s32.totalorder %s80, %s82
    %p89 = scmp.eq.s32.totalorder %s16, 1
    %p90 = por %p88, %p89
    %p91 = scmp.ne.s32.totalorder %s82, %s83
    %p92 = scmp.eq.s32.totalorder %s16, 0
    %p93 = por %p91, %p92
    %p94 = scmp.ne.s32.totalorder %s82, %s83
    %p95 = scmp.eq.s32.totalorder %s17, 1
    %p96 = por %p94, %p95
    %p98 = scmp.ne.s32.totalorder %s83, %s97
    %p99 = scmp.eq.s32.totalorder %s17, 0
    %p100 = por %p98, %p99
    %s101 = ssub.s32 %s18, %s30
    %p102 = scmp.eq.s32.totalorder %s101, 0
    %s104 = sadd.s32 %s103, 1
    %s105 = scalar_select %p102, %s103, %s104
    %p108 = pneg %p102
    %p109 = scmp.eq.s32.totalorder %s11, 1
    %p110 = por %p108, %p109
    %p111 = scmp.ne.s32.totalorder %s103, %s106
    %p112 = scmp.eq.s32.totalorder %s11, 0
    %p113 = por %p111, %p112
    %p114 = scmp.ne.s32.totalorder %s103, %s106
    %p115 = scmp.eq.s32.totalorder %s16, 1
    %p116 = por %p114, %p115
    %p117 = scmp.ne.s32.totalorder %s106, %s107
    %p118 = scmp.eq.s32.totalorder %s16, 0
    %p119 = por %p117, %p118
    %p120 = scmp.ne.s32.totalorder %s106, %s107
    %p121 = scmp.eq.s32.totalorder %s17, 1
    %p122 = por %p120, %p121
    %p124 = scmp.ne.s32.totalorder %s107, %s123
    %p125 = scmp.eq.s32.totalorder %s17, 0
    %p126 = por %p124, %p125
    %s128 = sadd.s32 %s127, 1
    %p131 = scmp.eq.s32.totalorder %s11, 1
    %p132 = scmp.ne.s32.totalorder %s127, %s129
    %p133 = scmp.eq.s32.totalorder %s11, 0
    %p134 = por %p132, %p133
    %p135 = scmp.ne.s32.totalorder %s127, %s129
    %p136 = scmp.eq.s32.totalorder %s16, 1
    %p137 = por %p135, %p136
    %p138 = scmp.ne.s32.totalorder %s129, %s130
    %p139 = scmp.eq.s32.totalorder %s16, 0
    %p140 = por %p138, %p139
    %p141 = scmp.ne.s32.totalorder %s129, %s130
    %p142 = scmp.eq.s32.totalorder %s17, 1
    %p143 = por %p141, %p142
    %p145 = scmp.ne.s32.totalorder %s130, %s144
    %p146 = scmp.eq.s32.totalorder %s17, 0
    %p147 = por %p145, %p146
    %s148 = ssub.s32 %s18, %s30
    %s149 = ssub.s32 %s19, %s26
    %s150 = sor.u32 %s148, %s149
    %p151 = scmp.eq.s32.totalorder %s150, 0
    %s153 = sadd.s32 %s152, 1
    %s154 = scalar_select %p151, %s152, %s153
    %p157 = pneg %p151
    %p158 = scmp.eq.s32.totalorder %s11, 1
    %p159 = por %p157, %p158
    %p160 = scmp.ne.s32.totalorder %s152, %s155
    %p161 = scmp.eq.s32.totalorder %s11, 0
    %p162 = por %p160, %p161
    %p163 = scmp.ne.s32.totalorder %s152, %s155
    %p164 = scmp.eq.s32.totalorder %s16, 1
    %p165 = por %p163, %p164
    %p166 = scmp.ne.s32.totalorder %s155, %s156
    %p167 = scmp.eq.s32.totalorder %s16, 0
    %p168 = por %p166, %p167
    %p169 = scmp.ne.s32.totalorder %s155, %s156
    %p170 = scmp.eq.s32.totalorder %s17, 1
    %p171 = por %p169, %p170
    %p173 = scmp.ne.s32.totalorder %s156, %s172
    %p174 = scmp.eq.s32.totalorder %s17, 0
    %p175 = por %p173, %p174
    %p176 = scmp.le.s32.totalorder 1, %s11
    %p177 = scmp.lt.s32.totalorder %s11, 3
    %p178 = pnand %p176, %p177
    %p179 = pneg %p178
    // Predicated region
    $region9: #{segmentation_heads_pallas.1} parent=5 // pred_check
      _
    $region10: #{segmentation_heads_pallas.1} parent=5 // pred_check_branch
      %181 = sbr.rel (%p178) target = $region12
    $region11: #{segmentation_heads_pallas.1} parent=5 // pred_region
      %s182 = ssub.s32 %s11, 1
      // Predicated region
      $region13: #{segmentation_heads_pallas.1} parent=11 // pred_check
        %p183 = pneg %p72
      $region14: #{segmentation_heads_pallas.1} parent=11 // pred_check_branch
        %185 = sbr.rel (%p183) target = $region16
      $region15: #{segmentation_heads_pallas.1} parent=11 // pred_region
        _
      $region16: #{segmentation_heads_pallas.1} parent=11 // pred_fallthru
        _
      // Predicated region
      $region17: #{segmentation_heads_pallas.1} parent=11 // pred_check
        %p186 = pneg %p93
      $region18: #{segmentation_heads_pallas.1} parent=11 // pred_check_branch
        %188 = sbr.rel (%p186) target = $region20
      $region19: #{segmentation_heads_pallas.1} parent=11 // pred_region
        _
      $region20: #{segmentation_heads_pallas.1} parent=11 // pred_fallthru
        _
      // Predicated region
      $region21: #{segmentation_heads_pallas.1} parent=11 // pred_check
        %p189 = pneg %p140
      $region22: #{segmentation_heads_pallas.1} parent=11 // pred_check_branch
        %191 = sbr.rel (%p189) target = $region24
      $region23: #{segmentation_heads_pallas.1} parent=11 // pred_region
        _
      $region24: #{segmentation_heads_pallas.1} parent=11 // pred_fallthru
        _
    $region12: #{segmentation_heads_pallas.1} parent=5 // pred_fallthru
      _
    %p192 = scmp.lt.s32.totalorder %s11, 2
    // Predicated region
    $region25: #{segmentation_heads_pallas.1} parent=5 // pred_check
      %p193 = pneg %p192
    $region26: #{segmentation_heads_pallas.1} parent=5 // pred_check_branch
      %195 = sbr.rel (%p193) target = $region28
    $region27: #{segmentation_heads_pallas.1} parent=5 // pred_region
      // Predicated region
      $region29: #{segmentation_heads_pallas.1} parent=27 // pred_check
        %p196 = pneg %p45
      $region30: #{segmentation_heads_pallas.1} parent=27 // pred_check_branch
        %198 = sbr.rel (%p196) target = $region32
      $region31: #{segmentation_heads_pallas.1} parent=27 // pred_region
        %s199 = smul.u32 2, %s19
        %p200 = scmp.lt.s32.totalorder %s18, 1
        %s201 = scalar_select %p200, %s18, 1
        %p202 = scmp.lt.s32.totalorder %s199, 1
        %s203 = scalar_select %p202, %s199, 1
        %s204 = smul.addr %s201, 6
        %s205 = sadd.s32 %s203, %s204
        %s206 = smul.addr %s205, 8
        %s207 = scalar_lea.vmem %s0, %s206
        %s208 = smul.u32 2, %s19
      $region32: #{segmentation_heads_pallas.1} parent=27 // pred_fallthru
        _
      // Predicated region
      $region33: #{segmentation_heads_pallas.1} parent=27 // pred_check
        %p209 = pneg %p113
      $region34: #{segmentation_heads_pallas.1} parent=27 // pred_check_branch
        %211 = sbr.rel (%p209) target = $region36
      $region35: #{segmentation_heads_pallas.1} parent=27 // pred_region
        %p212 = scmp.lt.s32.totalorder %s18, 1
        %s213 = scalar_select %p212, %s18, 1
        %s214 = smul.addr %s213, 10
        %s215 = smul.addr %s214, 8
        %s216 = scalar_lea.vmem %s3, %s215
      $region36: #{segmentation_heads_pallas.1} parent=27 // pred_fallthru
        _
    $region28: #{segmentation_heads_pallas.1} parent=5 // pred_fallthru
      _
    %p217 = scmp.le.s32.totalorder 1, %s11
    %p218 = scmp.lt.s32.totalorder %s11, 3
    %p219 = pnand %p217, %p218
    %p220 = pneg %p219
    // Predicated region
    $region37: #{segmentation_heads_pallas.1} parent=5 // pred_check
      _
    $region38: #{segmentation_heads_pallas.1} parent=5 // pred_check_branch
      %222 = sbr.rel (%p219) target = $region40
    $region39: #{segmentation_heads_pallas.1} parent=5 // pred_region
      %s223 = ssub.s32 %s11, 1
      %s224 = smul.u32 2, %s21
      %p225 = scmp.lt.s32.totalorder %s20, 1
      %s226 = scalar_select %p225, %s20, 1
      %p227 = scmp.lt.s32.totalorder %s224, 1
      %s228 = scalar_select %p227, %s224, 1
      %s229 = smul.addr %s226, 6
      %s230 = sadd.s32 %s228, %s229
      %s231 = smul.addr %s230, 8
      %s232 = scalar_lea.vmem %s0, %s231
      %p233 = pneg %p51
      %p234 = pneg %p48
      %p235 = pneg %p72
      %p236 = pneg %p69
      %p237 = pneg %p93
      %p238 = pneg %p90
      %p239 = scmp.lt.s32.totalorder %s20, 1
      %s240 = scalar_select %p239, %s20, 1
      %s241 = smul.addr %s240, 10
      %s242 = smul.addr %s241, 8
      %s243 = scalar_lea.vmem %s3, %s242
      %p244 = pneg %p119
      %p245 = pneg %p116
      %p246 = pneg %p140
      %p247 = pneg %p137
      %p248 = pneg %p168
      %p249 = pneg %p165
      %s250 = smul.u32 2, %s21
      %p251 = scmp.lt.s32.totalorder %s20, 1
      %s252 = scalar_select %p251, %s20, 1
      %p253 = scmp.lt.s32.totalorder %s250, 1
      %s254 = scalar_select %p253, %s250, 1
      %s255 = smul.addr %s252, 20
      %s256 = sadd.s32 %s254, %s255
      %s257 = smul.addr %s256, 8
      %s258 = scalar_lea.vmem %s5, %s257
      %s259 = smul.u32 2, %s21
      %p260 = scmp.lt.s32.totalorder %s20, 1
      %s261 = scalar_select %p260, %s20, 1
      %p262 = scmp.lt.s32.totalorder %s259, 1
      %s263 = scalar_select %p262, %s259, 1
      %s264 = smul.addr %s261, 6
      %s265 = sadd.s32 %s263, %s264
      %s266 = smul.addr %s265, 8
      %s267 = scalar_lea.vmem %s0, %s266
      %s268 = smul.u32 2, %s21
      %p269 = scmp.lt.s32.totalorder %s20, 1
      %s270 = scalar_select %p269, %s20, 1
      %s271 = smul.addr %s270, 10
      %s272 = smul.addr %s271, 8
      %s273 = scalar_lea.vmem %s3, %s272
      %s274 = smul.u32 2, %s21
      %p275 = scmp.lt.s32.totalorder %s20, 1
      %s276 = scalar_select %p275, %s20, 1
      %p277 = scmp.lt.s32.totalorder %s274, 1
      %s278 = scalar_select %p277, %s274, 1
      %s279 = smul.addr %s276, 20
      %s280 = sadd.s32 %s278, %s279
      %s281 = smul.addr %s280, 8
      %s282 = scalar_lea.vmem %s5, %s281
      %s283 = smul.u32 2, %s21
      %v284 = vld [vmem:[%s267] sm:$0xff]
      %v285 = vld [vmem:[%s267 + $0x8] sm:$0xff]
      %v286 = vld [vmem:[%s267 + $0x10] sm:$0xff]
      %v287 = vld [vmem:[%s267 + $0x18] sm:$0xff]
      %v288 = vld [vmem:[%s267 + $0x20] sm:$0x1f]
      %v289 = vld [vmem:[%s267 + $0x28] sm:$0x1f]
      %v290 = vld [vmem:[%s1] sm:$0xff]
      %v291 = vld [vmem:[%s1 + $0x8] sm:$0xff]
      %v292 = vld [vmem:[%s1 + $0x10] sm:$0x7f]
      %v293 = vld [vmem:[%s2] sm:$0xff]
      %v294 = vld [vmem:[%s2 + $0x8] sm:$0xff]
      %v295 = vld [vmem:[%s2 + $0x10] sm:$0x7f]
      %297 = vset.pattern.permute.xlu0 0
      %298 = vperm.xlu0 %297, %v293
      %v299 = vpop.permute.xlu0 %298
      %302 = vset.pattern.permute.xlu0 0
      %303 = vperm.xlu0 %302, %v294
      %v304 = vpop.permute.xlu0 %303
      %307 = vset.pattern.permute.xlu0 0
      %308 = vperm.xlu0 %307, %v295
      %v309 = vpop.permute.xlu0 %308
      %vm311 = vcmask 171008
      %v313 = vsel %vm311, %v290, 0
      %v316 = vsel %vm311, %v291, 0
      %v319 = vsel %vm311, %v292, 0
      %vm321 = vcmask 1044480
      %v323 = vsel %vm321, %v288, 0
      %v326 = vsel %vm321, %v289, 0
      %328 = vmatprep.subr.mxu0 %v285
      %329 = vmatpush1.msra.mxu0 %v284
      %330 = vmatprep.subr.mxu0 %v287
      %331 = vmatpush1.msra.mxu0 %v286
      %332 = vmatprep.subr.mxu0 %v326
      %333 = vmatpush1.msra.mxu0 %v323
      %334 = vmatprep.subr.mxu0 0.0
      %335 = vmatpush1.msra.mxu0 0.0
      %336 = vmatprep.subr.mxu0 0.0
      %337 = vmatpush1.msra.mxu0 0.0
      %338 = vmatprep.subr.mxu0 0.0
      %339 = vmatpush1.msra.mxu0 0.0
      %340 = vmatprep.subr.mxu0 0.0
      %341 = vmatpush1.msra.mxu0 0.0
      %342 = vmatprep.subr.mxu0 0.0
      %343 = vmatpush1.msra.mxu0 0.0
      %344 = vmatprep.subr.mxu0 0.0
      %345 = vmatpush1.msra.mxu0 0.0
      %346 = vmatprep.subr.mxu0 0.0
      %347 = vmatpush1.msra.mxu0 0.0
      %348 = vmatprep.subr.mxu0 0.0
      %349 = vmatpush1.msra.mxu0 0.0
      %350 = vmatprep.subr.mxu0 0.0
      %351 = vmatpush1.msra.mxu0 0.0
      %352 = vmatprep.subr.mxu0 0.0
      %353 = vmatpush1.msra.mxu0 0.0
      %354 = vmatprep.subr.mxu0 0.0
      %355 = vmatpush1.msra.mxu0 0.0
      %356 = vmatprep.subr.mxu0 0.0
      %357 = vmatpush1.msra.mxu0 0.0
      %358 = vmatprep.subr.mxu0 0.0
      %359 = vmatpush1.msra.mxu0 0.0
      %360 = vmatprep.subr.mxu0 0.0
      %361 = vmatpush1.msra.mxu0 0.0
      %362 = vmatprep.subr.mxu0 0.0
      %363 = vmatpush1.msra.mxu0 0.0
      %364 = vmatprep.subr.mxu0 0.0
      %365 = vmatpush1.msra.mxu0 0.0
      %366 = vmatprep.subr.mxu0 0.0
      %367 = vmatpush1.msra.mxu0 0.0
      %368 = vmatprep.subr.mxu0 0.0
      %369 = vmatpush1.msra.mxu0 0.0
      %370 = vmatprep.subr.mxu0 0.0
      %371 = vmatpush1.msra.mxu0 0.0
      %372 = vmatprep.subr.mxu0 0.0
      %373 = vmatpush1.msra.mxu0 0.0
      %374 = vmatprep.subr.mxu0 0.0
      %375 = vmatpush1.msra.mxu0 0.0
      %376 = vmatprep.subr.mxu0 0.0
      %377 = vmatpush1.msra.mxu0 0.0
      %378 = vmatprep.subr.mxu0 0.0
      %379 = vmatpush1.msra.mxu0 0.0
      %380 = vmatprep.subr.mxu0 0.0
      %381 = vmatpush1.msra.mxu0 0.0
      %382 = vmatprep.subr.mxu0 0.0
      %383 = vmatpush1.msra.mxu0 0.0
      %384 = vmatprep.subr.mxu0 0.0
      %385 = vmatpush1.msra.mxu0 0.0
      %386 = vmatprep.subr.mxu0 0.0
      %387 = vmatpush1.msra.mxu0 0.0
      %388 = vmatprep.subr.mxu0 0.0
      %389 = vmatpush1.msra.mxu0 0.0
      %390 = vmatprep.subr.mxu0 0.0
      %391 = vmatpush1.msra.mxu0 0.0
      %392 = vmatprep.mubr.f32.mxu0 0.0
      %393 = vmatmul.mubr.f32.gmra.mrb[0].mxu0 %v313
      %v394 = vpop.f32.mrb[0].mxu0
      %v395 = vadd.f32 %v299, %v394
      %v396 = vpop.f32.mrb[0].mxu0
      %v397 = vadd.f32 %v299, %v396
      %398 = vmatprep.mubr.f32.mxu0 0.0
      %399 = vmatmul.mubr.f32.gmra.mrb[0].mxu0 %v316
      %v400 = vpop.f32.mrb[0].mxu0
      %v401 = vadd.f32 %v304, %v400
      %v402 = vpop.f32.mrb[0].mxu0
      %v403 = vadd.f32 %v304, %v402
      %404 = vmatprep.mubr.f32.mxu0 0.0
      %405 = vmatmul.mubr.f32.gmra.mrb[0].mxu0 %v319
      %v406 = vpop.f32.mrb[0].mxu0
      %v407 = vadd.f32 %v309, %v406
      %v408 = vpop.f32.mrb[0].mxu0
      %v409 = vadd.f32 %v309, %v408
      %410 = vdwg.mxu0
      %vm411 = vcmp.gt.f32.partialorder %v395, 0.0
      %vm412 = vcmp.gt.f32.partialorder %v397, 0.0
      %vm413 = vcmp.gt.f32.partialorder %v401, 0.0
      %vm414 = vcmp.gt.f32.partialorder %v403, 0.0
      %vm415 = vcmp.gt.f32.partialorder %v407, 0.0
      %vm416 = vcmp.gt.f32.partialorder %v409, 0.0
      %v417 = vmul.f32 %v395, 0.01
      %v418 = vmul.f32 %v397, 0.01
      %v419 = vmul.f32 %v401, 0.01
      %v420 = vmul.f32 %v403, 0.01
      %v421 = vmul.f32 %v407, 0.01
      %v422 = vmul.f32 %v409, 0.01
      %v423 = vsel %vm411, %v395, %v417
      %v424 = vsel %vm412, %v397, %v418
      %v425 = vsel %vm413, %v401, %v419
      %v426 = vsel %vm414, %v403, %v420
      %v427 = vsel %vm415, %v407, %v421
      %v428 = vsel %vm416, %v409, %v422
      %v429 = vld [vmem:[%s273] sm:$0xff]
      %v430 = vld [vmem:[%s273 + $0x8] sm:$0xff]
      %v431 = vld [vmem:[%s273 + $0x10] sm:$0xff]
      %v432 = vld [vmem:[%s273 + $0x18] sm:$0xff]
      %v433 = vld [vmem:[%s273 + $0x20] sm:$0xff]
      %v434 = vld [vmem:[%s273 + $0x28] sm:$0xff]
      %v435 = vld [vmem:[%s273 + $0x30] sm:$0xff]
      %v436 = vld [vmem:[%s273 + $0x38] sm:$0xff]
      %v437 = vld [vmem:[%s273 + $0x40] sm:$0xff]
      %v438 = vld [vmem:[%s273 + $0x48] sm:$0x7]
      %v439 = vld [vmem:[%s4] sm:$0xff]
      %v440 = vld [vmem:[%s4 + $0x8] sm:$0xff]
      %v441 = vld [vmem:[%s4 + $0x10] sm:$0xff]
      %v442 = vld [vmem:[%s4 + $0x18] sm:$0xff]
      %v443 = vld [vmem:[%s4 + $0x20] sm:$0xff]
      %v444 = vld [vmem:[%s4 + $0x28] sm:$0xff]
      %v445 = vld [vmem:[%s4 + $0x30] sm:$0xff]
      %v446 = vld [vmem:[%s4 + $0x38] sm:$0xff]
      %v447 = vld [vmem:[%s4 + $0x40] sm:$0xff]
      %v448 = vld [vmem:[%s4 + $0x48] sm:$0x7]
      %450 = vset.pattern.permute.xlu0 0
      %451 = vperm.xlu0 %450, %v439
      %v452 = vpop.permute.xlu0 %451
      %455 = vset.pattern.permute.xlu0 0
      %456 = vperm.xlu0 %455, %v440
      %v457 = vpop.permute.xlu0 %456
      %460 = vset.pattern.permute.xlu0 0
      %461 = vperm.xlu0 %460, %v441
      %v462 = vpop.permute.xlu0 %461
      %465 = vset.pattern.permute.xlu0 0
      %466 = vperm.xlu0 %465, %v442
      %v467 = vpop.permute.xlu0 %466
      %470 = vset.pattern.permute.xlu0 0
      %471 = vperm.xlu0 %470, %v443
      %v472 = vpop.permute.xlu0 %471
      %475 = vset.pattern.permute.xlu0 0
      %476 = vperm.xlu0 %475, %v444
      %v477 = vpop.permute.xlu0 %476
      %480 = vset.pattern.permute.xlu0 0
      %481 = vperm.xlu0 %480, %v445
      %v482 = vpop.permute.xlu0 %481
      %485 = vset.pattern.permute.xlu0 0
      %486 = vperm.xlu0 %485, %v446
      %v487 = vpop.permute.xlu0 %486
      %490 = vset.pattern.permute.xlu0 0
      %491 = vperm.xlu0 %490, %v447
      %v492 = vpop.permute.xlu0 %491
      %495 = vset.pattern.permute.xlu0 0
      %496 = vperm.xlu0 %495, %v448
      %v497 = vpop.permute.xlu0 %496
      %vm499 = vcmask 187392
      %v501 = vsel %vm499, %v429, 0
      %v504 = vsel %vm499, %v430, 0
      %v507 = vsel %vm499, %v431, 0
      %v510 = vsel %vm499, %v432, 0
      %v513 = vsel %vm499, %v433, 0
      %v516 = vsel %vm499, %v434, 0
      %v519 = vsel %vm499, %v435, 0
      %v522 = vsel %vm499, %v436, 0
      %v525 = vsel %vm499, %v437, 0
      %v528 = vsel %vm499, %v438, 0
      %vm530 = vcmask 1046528
      %v532 = vsel %vm530, %v427, 0
      %v535 = vsel %vm530, %v428, 0
      %537 = vmatprep.subr.mxu0 %v424
      %538 = vmatpush1.msra.mxu0 %v423
      %539 = vmatprep.subr.mxu0 %v426
      %540 = vmatpush1.msra.mxu0 %v425
      %541 = vmatprep.subr.mxu0 %v535
      %542 = vmatpush1.msra.mxu0 %v532
      %543 = vmatprep.subr.mxu0 0.0
      %544 = vmatpush1.msra.mxu0 0.0
      %545 = vmatprep.subr.mxu0 0.0
      %546 = vmatpush1.msra.mxu0 0.0
      %547 = vmatprep.subr.mxu0 0.0
      %548 = vmatpush1.msra.mxu0 0.0
      %549 = vmatprep.subr.mxu0 0.0
      %550 = vmatpush1.msra.mxu0 0.0
      %551 = vmatprep.subr.mxu0 0.0
      %552 = vmatpush1.msra.mxu0 0.0
      %553 = vmatprep.subr.mxu0 0.0
      %554 = vmatpush1.msra.mxu0 0.0
      %555 = vmatprep.subr.mxu0 0.0
      %556 = vmatpush1.msra.mxu0 0.0
      %557 = vmatprep.subr.mxu0 0.0
      %558 = vmatpush1.msra.mxu0 0.0
      %559 = vmatprep.subr.mxu0 0.0
      %560 = vmatpush1.msra.mxu0 0.0
      %561 = vmatprep.subr.mxu0 0.0
      %562 = vmatpush1.msra.mxu0 0.0
      %563 = vmatprep.subr.mxu0 0.0
      %564 = vmatpush1.msra.mxu0 0.0
      %565 = vmatprep.subr.mxu0 0.0
      %566 = vmatpush1.msra.mxu0 0.0
      %567 = vmatprep.subr.mxu0 0.0
      %568 = vmatpush1.msra.mxu0 0.0
      %569 = vmatprep.subr.mxu0 0.0
      %570 = vmatpush1.msra.mxu0 0.0
      %571 = vmatprep.subr.mxu0 0.0
      %572 = vmatpush1.msra.mxu0 0.0
      %573 = vmatprep.subr.mxu0 0.0
      %574 = vmatpush1.msra.mxu0 0.0
      %575 = vmatprep.subr.mxu0 0.0
      %576 = vmatpush1.msra.mxu0 0.0
      %577 = vmatprep.subr.mxu0 0.0
      %578 = vmatpush1.msra.mxu0 0.0
      %579 = vmatprep.subr.mxu0 0.0
      %580 = vmatpush1.msra.mxu0 0.0
      %581 = vmatprep.subr.mxu0 0.0
      %582 = vmatpush1.msra.mxu0 0.0
      %583 = vmatprep.subr.mxu0 0.0
      %584 = vmatpush1.msra.mxu0 0.0
      %585 = vmatprep.subr.mxu0 0.0
      %586 = vmatpush1.msra.mxu0 0.0
      %587 = vmatprep.subr.mxu0 0.0
      %588 = vmatpush1.msra.mxu0 0.0
      %589 = vmatprep.subr.mxu0 0.0
      %590 = vmatpush1.msra.mxu0 0.0
      %591 = vmatprep.subr.mxu0 0.0
      %592 = vmatpush1.msra.mxu0 0.0
      %593 = vmatprep.subr.mxu0 0.0
      %594 = vmatpush1.msra.mxu0 0.0
      %595 = vmatprep.subr.mxu0 0.0
      %596 = vmatpush1.msra.mxu0 0.0
      %597 = vmatprep.subr.mxu0 0.0
      %598 = vmatpush1.msra.mxu0 0.0
      %599 = vmatprep.subr.mxu0 0.0
      %600 = vmatpush1.msra.mxu0 0.0
      %601 = vmatprep.mubr.f32.mxu0 0.0
      %602 = vmatmul.mubr.f32.gmra.mrb[0].mxu0 %v501
      %v603 = vpop.f32.mrb[0].mxu0
      %v604 = vadd.f32 %v452, %v603
      %v605 = vpop.f32.mrb[0].mxu0
      %v606 = vadd.f32 %v452, %v605
      %607 = vmatprep.mubr.f32.mxu0 0.0
      %608 = vmatmul.mubr.f32.gmra.mrb[0].mxu0 %v504
      %v609 = vpop.f32.mrb[0].mxu0
      %v610 = vadd.f32 %v457, %v609
      %v611 = vpop.f32.mrb[0].mxu0
      %v612 = vadd.f32 %v457, %v611
      %613 = vmatprep.mubr.f32.mxu0 0.0
      %614 = vmatmul.mubr.f32.gmra.mrb[0].mxu0 %v507
      %v615 = vpop.f32.mrb[0].mxu0
      %v616 = vadd.f32 %v462, %v615
      %v617 = vpop.f32.mrb[0].mxu0
      %v618 = vadd.f32 %v462, %v617
      %619 = vmatprep.mubr.f32.mxu0 0.0
      %620 = vmatmul.mubr.f32.gmra.mrb[0].mxu0 %v510
      %v621 = vpop.f32.mrb[0].mxu0
      %v622 = vadd.f32 %v467, %v621
      %v623 = vpop.f32.mrb[0].mxu0
      %v624 = vadd.f32 %v467, %v623
      %625 = vmatprep.mubr.f32.mxu0 0.0
      %626 = vmatmul.mubr.f32.gmra.mrb[0].mxu0 %v513
      %v627 = vpop.f32.mrb[0].mxu0
      %v628 = vadd.f32 %v472, %v627
      %v629 = vpop.f32.mrb[0].mxu0
      %v630 = vadd.f32 %v472, %v629
      %631 = vmatprep.mubr.f32.mxu0 0.0
      %632 = vmatmul.mubr.f32.gmra.mrb[0].mxu0 %v516
      %v633 = vpop.f32.mrb[0].mxu0
      %v634 = vadd.f32 %v477, %v633
      %v635 = vpop.f32.mrb[0].mxu0
      %v636 = vadd.f32 %v477, %v635
      %637 = vmatprep.mubr.f32.mxu0 0.0
      %638 = vmatmul.mubr.f32.gmra.mrb[0].mxu0 %v519
      %v639 = vpop.f32.mrb[0].mxu0
      %v640 = vadd.f32 %v482, %v639
      %v641 = vpop.f32.mrb[0].mxu0
      %v642 = vadd.f32 %v482, %v641
      %643 = vmatprep.mubr.f32.mxu0 0.0
      %644 = vmatmul.mubr.f32.gmra.mrb[0].mxu0 %v522
      %v645 = vpop.f32.mrb[0].mxu0
      %v646 = vadd.f32 %v487, %v645
      %v647 = vpop.f32.mrb[0].mxu0
      %v648 = vadd.f32 %v487, %v647
      %649 = vmatprep.mubr.f32.mxu0 0.0
      %650 = vmatmul.mubr.f32.gmra.mrb[0].mxu0 %v525
      %v651 = vpop.f32.mrb[0].mxu0
      %v652 = vadd.f32 %v492, %v651
      %v653 = vpop.f32.mrb[0].mxu0
      %v654 = vadd.f32 %v492, %v653
      %655 = vmatprep.mubr.f32.mxu0 0.0
      %656 = vmatmul.mubr.f32.gmra.mrb[0].mxu0 %v528
      %v657 = vpop.f32.mrb[0].mxu0
      %v658 = vadd.f32 %v497, %v657
      %v659 = vpop.f32.mrb[0].mxu0
      %v660 = vadd.f32 %v497, %v659
      %661 = vdwg.mxu0
      %662 = vst [vmem:[%s282] sm:$0xff] %v604
      %663 = vst [vmem:[%s282 + $0x8] sm:$0xff] %v606
      %664 = vst [vmem:[%s282 + $0x10] sm:$0xff] %v610
      %665 = vst [vmem:[%s282 + $0x18] sm:$0xff] %v612
      %666 = vst [vmem:[%s282 + $0x20] sm:$0xff] %v616
      %667 = vst [vmem:[%s282 + $0x28] sm:$0xff] %v618
      %668 = vst [vmem:[%s282 + $0x30] sm:$0xff] %v622
      %669 = vst [vmem:[%s282 + $0x38] sm:$0xff] %v624
      %670 = vst [vmem:[%s282 + $0x40] sm:$0xff] %v628
      %671 = vst [vmem:[%s282 + $0x48] sm:$0xff] %v630
      %672 = vst [vmem:[%s282 + $0x50] sm:$0xff] %v634
      %673 = vst [vmem:[%s282 + $0x58] sm:$0xff] %v636
      %674 = vst [vmem:[%s282 + $0x60] sm:$0xff] %v640
      %675 = vst [vmem:[%s282 + $0x68] sm:$0xff] %v642
      %676 = vst [vmem:[%s282 + $0x70] sm:$0xff] %v646
      %677 = vst [vmem:[%s282 + $0x78] sm:$0xff] %v648
      %678 = vst [vmem:[%s282 + $0x80] sm:$0xff] %v652
      %679 = vst [vmem:[%s282 + $0x88] sm:$0xff] %v654
      %680 = vst [vmem:[%s282 + $0x90] sm:$0x7] %v658
      %681 = vst [vmem:[%s282 + $0x98] sm:$0x7] %v660
      %s682 = smul.u32 2, %s21
      %p683 = scmp.lt.s32.totalorder %s20, 1
      %s684 = scalar_select %p683, %s20, 1
      %p685 = scmp.lt.s32.totalorder %s682, 1
      %s686 = scalar_select %p685, %s682, 1
      %s687 = smul.addr %s684, 20
      %s688 = sadd.s32 %s686, %s687
      %s689 = smul.addr %s688, 8
      %s690 = scalar_lea.vmem %s5, %s689
      // Predicated region
      $region41: #{segmentation_heads_pallas.1} parent=39 // pred_check
        %p691 = pneg %p165
      $region42: #{segmentation_heads_pallas.1} parent=39 // pred_check_branch
        %693 = sbr.rel (%p691) target = $region44
      $region43: #{segmentation_heads_pallas.1} parent=39 // pred_region
        %s694 = smul.u32 2, %s21
      $region44: #{segmentation_heads_pallas.1} parent=39 // pred_fallthru
        _
    $region40: #{segmentation_heads_pallas.1} parent=5 // pred_fallthru
      _
    %p695 = scmp.le.s32.totalorder 2, %s11
    // Predicated region
    $region45: #{segmentation_heads_pallas.1} parent=5 // pred_check
      %p696 = pneg %p695
    $region46: #{segmentation_heads_pallas.1} parent=5 // pred_check_branch
      %698 = sbr.rel (%p696) target = $region48
    $region47: #{segmentation_heads_pallas.1} parent=5 // pred_region
      %s699 = ssub.s32 %s11, 2
      // Predicated region
      $region49: #{segmentation_heads_pallas.1} parent=47 // pred_check
        %p700 = pneg %p171
      $region50: #{segmentation_heads_pallas.1} parent=47 // pred_check_branch
        %702 = sbr.rel (%p700) target = $region52
      $region51: #{segmentation_heads_pallas.1} parent=47 // pred_region
        %s703 = smul.u32 2, %s23
        %p704 = scmp.lt.s32.totalorder %s22, 1
        %s705 = scalar_select %p704, %s22, 1
        %p706 = scmp.lt.s32.totalorder %s703, 1
        %s707 = scalar_select %p706, %s703, 1
        %s708 = smul.addr %s705, 20
        %s709 = sadd.s32 %s707, %s708
        %s710 = smul.addr %s709, 8
        %s711 = scalar_lea.vmem %s5, %s710
      $region52: #{segmentation_heads_pallas.1} parent=47 // pred_fallthru
        _
    $region48: #{segmentation_heads_pallas.1} parent=5 // pred_fallthru
      _
  $region6: #{segmentation_heads_pallas.1} parent=0 // loop_footer
    %s15 = sadd.s32 1, %s11
  $region7: #{segmentation_heads_pallas.1} parent=0 // loop_footer_branch
    %10 = sbr.rel target = $region3
  $region8: #{segmentation_heads_pallas.1} parent=0 // loop_exit
    _

</llo_original>
